<compile_context>
chip_gen: v5e
topology: v5e:2x2
jax: 0.10.0
libtpu: 0.0.40
codegen_flags: <defaults>
</compile_context>

<pallas_src>
import functools

import jax
import jax.numpy as jnp
from jax.experimental import pallas as pl
from jax.experimental.pallas import tpu as pltpu


def _round_up(x, m):
    return ((x + m - 1) // m) * m


def _fused_mlp_kernel(*refs, num_layers):
    """refs = (x_ref, w0, b0, w1, b1, ..., w_{L-1}, b_{L-1}, o_ref).

    Computes the whole MLP for one batch tile; hidden activations never leave
    the chip.  tanh lowers to the EUP slot, so fusing it is effectively free.
    """
    x_ref = refs[0]
    o_ref = refs[-1]
    wb_refs = refs[1:-1]

    h = x_ref[...].astype(jnp.float32)
    for layer in range(num_layers):
        wt = wb_refs[2 * layer][...]
        b = wb_refs[2 * layer + 1][...]
        h = jnp.dot(h, wt, preferred_element_type=jnp.float32) + b
        if layer < num_layers - 1:
            h = jnp.tanh(h)
    o_ref[...] = h.astype(o_ref.dtype)


def mlp_critic_forward(params, x, *, tm_cap=1024,
                       vmem_budget_bytes=16 * 1024 * 1024):
    """Fused MLPCritic forward: a single pallas_call for all layers.

    params: list of (wt, b) with wt: [fan_in, fan_out], b: [1, fan_out].
    x: [batch, input_dim] float32.
    """
    num_layers = len(params)
    M, K = x.shape
    out_dim = params[-1][0].shape[1]

    # Lane-dense output: pad the last layer's output features to a multiple of
    # 128 so the output store is an unmasked full-lane vst.  Padded columns are
    # zero-weight/zero-bias and sliced away in the wrapper.
    n_out_pad = _round_up(max(out_dim, 1), 128)
    wt_last, b_last = params[-1]
    if n_out_pad != out_dim:
        wt_last = jnp.pad(wt_last, ((0, 0), (0, n_out_pad - out_dim)))
        b_last = jnp.pad(b_last, ((0, 0), (0, n_out_pad - out_dim)))
    padded_params = list(params[:-1]) + [(wt_last, b_last)]

    # Batch tile: largest multiple of 8 whose double-buffered input+output
    # tiles stay well inside every generation's scoped VMEM budget (the
    # conservative 16 MiB cap keeps headroom on v7x's 64 MiB VMEM; weights are
    # tiny and resident).
    bytes_per_row = (K + n_out_pad) * 4 * 2        # f32, in + out, double-buffered
    tm_fit = max(8, (vmem_budget_bytes // bytes_per_row) // 8 * 8)
    tm = int(min(tm_cap, tm_fit, _round_up(M, 8)))

    m_pad = _round_up(M, tm)
    if m_pad != M:
        x = jnp.pad(x, ((0, m_pad - M), (0, 0)))
    grid = (m_pad // tm,)

    in_specs = [pl.BlockSpec((tm, K), lambda i: (i, 0))]
    flat_wb = []
    for wt, b in padded_params:
        k_l, n_l = wt.shape
        in_specs.append(pl.BlockSpec((k_l, n_l), lambda i: (0, 0)))
        in_specs.append(pl.BlockSpec((1, n_l), lambda i: (0, 0)))
        flat_wb.extend([wt, b])

    out = pl.pallas_call(
        functools.partial(_fused_mlp_kernel, num_layers=num_layers),
        out_shape=jax.ShapeDtypeStruct((m_pad, n_out_pad), x.dtype),
        grid=grid,
        in_specs=in_specs,
        out_specs=pl.BlockSpec((tm, n_out_pad), lambda i: (i, 0)),
        compiler_params=pltpu.CompilerParams(
            # Batch tiles are independent: shard them across TensorCores (v7x);
            # harmless no-op on single-TC v5e/v6e.
            dimension_semantics=("parallel",),
        ),
    )(x, *flat_wb)

    return out[:M, :out_dim]


def init_mlp_critic_params(key, num_of_layers, input_dim, hidden_dim, output_dim):
    """Deterministic init mimicking PyTorch Linear default: U(-1/sqrt(fan_in), +)."""
    if num_of_layers < 1:
        raise ValueError("number of layers should be positive")
    if num_of_layers == 1:
        dims = [(input_dim, output_dim)]
    else:
        dims = [(input_dim, hidden_dim)]
        for _ in range(num_of_layers - 2):
            dims.append((hidden_dim, hidden_dim))
        dims.append((hidden_dim, output_dim))

    params = []
    for (fan_in, fan_out) in dims:
        key, kw, kb = jax.random.split(key, 3)
        bound = 1.0 / jnp.sqrt(float(fan_in))
        wt = jax.random.uniform(kw, (fan_in, fan_out), jnp.float32, -bound, bound)
        b = jax.random.uniform(kb, (1, fan_out), jnp.float32, -bound, bound)
        params.append((wt, b))
    return params


def mlp_critic_reference(params, x):
    num_of_layers = len(params)
    if num_of_layers == 1:
        wt, b = params[0]
        return x @ wt + b
    h = x
    for layer in range(num_of_layers - 1):
        wt, b = params[layer]
        h = jnp.tanh(h @ wt + b)
    wt, b = params[-1]
    return h @ wt + b


if __name__ == "__main__":
    num_of_layers = 3
    input_dim = 16
    hidden_dim = 32
    output_dim = 1
    batch = 2

    key = jax.random.PRNGKey(0)
    key, kx = jax.random.split(key)
    x = jax.random.normal(kx, (batch, input_dim), jnp.float32)

    params = init_mlp_critic_params(key, num_of_layers, input_dim, hidden_dim,
                                    output_dim)

    out = mlp_critic_forward(params, x)
    out = jax.block_until_ready(out)

    ref = mlp_critic_reference(params, x)
    assert out.shape == (batch, output_dim)
    assert jnp.allclose(out, ref, atol=1e-5, rtol=1e-5)

    # Extra robustness check: ragged batch + multi-tile grid (grid=(3,), tm=16).
    key, kx2 = jax.random.split(key)
    x2 = jax.random.normal(kx2, (37, input_dim), jnp.float32)
    out2 = jax.block_until_ready(mlp_critic_forward(params, x2, tm_cap=16))
    ref2 = mlp_critic_reference(params, x2)
    assert out2.shape == (37, output_dim)
    assert jnp.allclose(out2, ref2, atol=1e-5, rtol=1e-5)

    print("KERNEL_OK")
</pallas_src>

<mosaic_0001>
module attributes {stable_mosaic.version = 11 : i64} {
  func.func @_fused_mlp_kernel(%arg0: i32, %arg1: memref<8x16xf32, #tpu.memory_space<vmem>>, %arg2: memref<16x32xf32, #tpu.memory_space<vmem>>, %arg3: memref<1x32xf32, #tpu.memory_space<vmem>>, %arg4: memref<32x32xf32, #tpu.memory_space<vmem>>, %arg5: memref<1x32xf32, #tpu.memory_space<vmem>>, %arg6: memref<32x128xf32, #tpu.memory_space<vmem>>, %arg7: memref<1x128xf32, #tpu.memory_space<vmem>>, %arg8: memref<8x128xf32, #tpu.memory_space<vmem>>) attributes {dimension_semantics = [#tpu.dimension_semantics<parallel>], iteration_bounds = array<i64: 1>, scalar_prefetch = 0 : i64, scratch_operands = 0 : i64, tpu.core_type = #tpu.core_type<tc>, window_params = [{transform_indices = @transform_0, window_bounds = array<i64: 8, 16>}, {pipeline_mode = #tpu.pipeline_mode<synchronous>, transform_indices = @transform_1, window_bounds = array<i64: 16, 32>}, {pipeline_mode = #tpu.pipeline_mode<synchronous>, transform_indices = @transform_2, window_bounds = array<i64: 1, 32>}, {pipeline_mode = #tpu.pipeline_mode<synchronous>, transform_indices = @transform_3, window_bounds = array<i64: 32, 32>}, {pipeline_mode = #tpu.pipeline_mode<synchronous>, transform_indices = @transform_4, window_bounds = array<i64: 1, 32>}, {pipeline_mode = #tpu.pipeline_mode<synchronous>, transform_indices = @transform_5, window_bounds = array<i64: 32, 128>}, {pipeline_mode = #tpu.pipeline_mode<synchronous>, transform_indices = @transform_6, window_bounds = array<i64: 1, 128>}, {transform_indices = @transform_7, window_bounds = array<i64: 8, 128>}]} {
    %c0 = arith.constant 0 : index
    %c0_0 = arith.constant 0 : index
    %0 = vector.load %arg1[%c0, %c0_0] : memref<8x16xf32, #tpu.memory_space<vmem>>, vector<8x16xf32>
    %c0_1 = arith.constant 0 : index
    %c0_2 = arith.constant 0 : index
    %1 = vector.load %arg2[%c0_1, %c0_2] : memref<16x32xf32, #tpu.memory_space<vmem>>, vector<16x32xf32>
    %c0_3 = arith.constant 0 : index
    %c0_4 = arith.constant 0 : index
    %2 = vector.load %arg3[%c0_3, %c0_4] : memref<1x32xf32, #tpu.memory_space<vmem>>, vector<1x32xf32>
    %cst = arith.constant dense<0.000000e+00> : vector<8x32xf32>
    %3 = tpu.matmul %0, %1, %cst {dimension_numbers = #tpu.dot_dimension_numbers<[1], [0], [0], [1], [0, 0, 1, 1], [], []>} : vector<8x16xf32>, vector<16x32xf32>, vector<8x32xf32> -> vector<8x32xf32>
    %4 = vector.broadcast %2 : vector<1x32xf32> to vector<8x32xf32>
    %5 = arith.addf %3, %4 : vector<8x32xf32>
    %6 = math.tanh %5 : vector<8x32xf32>
    %c0_5 = arith.constant 0 : index
    %c0_6 = arith.constant 0 : index
    %7 = vector.load %arg4[%c0_5, %c0_6] : memref<32x32xf32, #tpu.memory_space<vmem>>, vector<32x32xf32>
    %c0_7 = arith.constant 0 : index
    %c0_8 = arith.constant 0 : index
    %8 = vector.load %arg5[%c0_7, %c0_8] : memref<1x32xf32, #tpu.memory_space<vmem>>, vector<1x32xf32>
    %cst_9 = arith.constant dense<0.000000e+00> : vector<8x32xf32>
    %9 = tpu.matmul %6, %7, %cst_9 {dimension_numbers = #tpu.dot_dimension_numbers<[1], [0], [0], [1], [0, 0, 1, 1], [], []>} : vector<8x32xf32>, vector<32x32xf32>, vector<8x32xf32> -> vector<8x32xf32>
    %10 = vector.broadcast %8 : vector<1x32xf32> to vector<8x32xf32>
    %11 = arith.addf %9, %10 : vector<8x32xf32>
    %12 = math.tanh %11 : vector<8x32xf32>
    %c0_10 = arith.constant 0 : index
    %c0_11 = arith.constant 0 : index
    %13 = vector.load %arg6[%c0_10, %c0_11] : memref<32x128xf32, #tpu.memory_space<vmem>>, vector<32x128xf32>
    %c0_12 = arith.constant 0 : index
    %c0_13 = arith.constant 0 : index
    %14 = vector.load %arg7[%c0_12, %c0_13] : memref<1x128xf32, #tpu.memory_space<vmem>>, vector<1x128xf32>
    %cst_14 = arith.constant dense<0.000000e+00> : vector<8x128xf32>
    %15 = tpu.matmul %12, %13, %cst_14 {dimension_numbers = #tpu.dot_dimension_numbers<[1], [0], [0], [1], [0, 0, 1, 1], [], []>} : vector<8x32xf32>, vector<32x128xf32>, vector<8x128xf32> -> vector<8x128xf32>
    %16 = vector.broadcast %14 : vector<1x128xf32> to vector<8x128xf32>
    %17 = arith.addf %15, %16 : vector<8x128xf32>
    %c0_15 = arith.constant 0 : index
    %c0_16 = arith.constant 0 : index
    %18 = vector.load %arg8[%c0_15, %c0_16] : memref<8x128xf32, #tpu.memory_space<vmem>>, vector<8x128xf32>
    tpu.vector_store %arg8[%c0_15, %c0_16], %17 {strides = array<i32>} : memref<8x128xf32, #tpu.memory_space<vmem>>, vector<8x128xf32>,
    return
  }
  func.func @transform_0(%arg0: i32) -> (i32, i32) {
    %c0_i32 = arith.constant 0 : i32
    %c0_i32_0 = arith.constant 0 : i32
    return %arg0, %c0_i32 : i32, i32
  }
  func.func @transform_1(%arg0: i32) -> (i32, i32) {
    %c0_i32 = arith.constant 0 : i32
    %c0_i32_0 = arith.constant 0 : i32
    %c0_i32_1 = arith.constant 0 : i32
    return %c0_i32, %c0_i32_0 : i32, i32
  }
  func.func @transform_2(%arg0: i32) -> (i32, i32) {
    %c0_i32 = arith.constant 0 : i32
    %c0_i32_0 = arith.constant 0 : i32
    %c0_i32_1 = arith.constant 0 : i32
    return %c0_i32, %c0_i32_0 : i32, i32
  }
  func.func @transform_3(%arg0: i32) -> (i32, i32) {
    %c0_i32 = arith.constant 0 : i32
    %c0_i32_0 = arith.constant 0 : i32
    %c0_i32_1 = arith.constant 0 : i32
    return %c0_i32, %c0_i32_0 : i32, i32
  }
  func.func @transform_4(%arg0: i32) -> (i32, i32) {
    %c0_i32 = arith.constant 0 : i32
    %c0_i32_0 = arith.constant 0 : i32
    %c0_i32_1 = arith.constant 0 : i32
    return %c0_i32, %c0_i32_0 : i32, i32
  }
  func.func @transform_5(%arg0: i32) -> (i32, i32) {
    %c0_i32 = arith.constant 0 : i32
    %c0_i32_0 = arith.constant 0 : i32
    %c0_i32_1 = arith.constant 0 : i32
    return %c0_i32, %c0_i32_0 : i32, i32
  }
  func.func @transform_6(%arg0: i32) -> (i32, i32) {
    %c0_i32 = arith.constant 0 : i32
    %c0_i32_0 = arith.constant 0 : i32
    %c0_i32_1 = arith.constant 0 : i32
    return %c0_i32, %c0_i32_0 : i32, i32
  }
  func.func @transform_7(%arg0: i32) -> (i32, i32) {
    %c0_i32 = arith.constant 0 : i32
    %c0_i32_0 = arith.constant 0 : i32
    return %arg0, %c0_i32 : i32, i32
  }
}

</mosaic_0001>

<llo_original>
// kernel: tpu_custom_call.1
$region0: #{tpu_custom_call.1}
  #allocation0 [shape = 'u32[]', space=smem, size = 0x4, offset = 0x4, fixed_abs, tag = 'smem constant byte address 0x4 - core index']
  #allocation1 [shape = 'u32[72,128]{1,0:T(1,128)}', space=vmem, size = 0x9000, scoped, tag = 'internal scratch']
  %s0 = inlined_call_operand.hbm [shape: f32[8,16], index: 0, kind: input, shape index: {}]
  %s1 = inlined_call_operand.hbm [shape: f32[16,32], index: 1, kind: input, shape index: {}]
  %s2 = inlined_call_operand.vmem [shape: f32[1,32], index: 2, kind: input, shape index: {}]
  %s3 = inlined_call_operand.hbm [shape: f32[32,32], index: 3, kind: input, shape index: {}]
  %s4 = inlined_call_operand.vmem [shape: f32[1,32], index: 4, kind: input, shape index: {}]
  %s5 = inlined_call_operand.hbm [shape: f32[32,128], index: 5, kind: input, shape index: {}]
  %s6 = inlined_call_operand.vmem [shape: f32[1,128], index: 6, kind: input, shape index: {}]
  %s7 = inlined_call_operand.hbm [shape: f32[8,128], index: 7, kind: output, shape index: {}]
  %s8 = sld [smem:[#allocation0]]
  $region54: #{tpu_custom_call.1} parent=0
    _
  %s10 = ssub.s32 1, %s8
  %s11 = scalar_select 0, %s10, %s8
  $region1: #{tpu_custom_call.1} parent=0
    #allocation2 [shape = 'u8[4096]{0}', space=vmem, size = 0x1000, scoped, tag = 'input window, operand 0, single buffered']
    #allocation3 [shape = 's32[1]{0}', space=sflag, size = 0x4, scoped, tag = 'scoped memory for tpu_custom_call.1']
    #allocation4 [shape = 's32[1]{0}', space=sflag, size = 0x4, scoped, tag = 'scoped memory for tpu_custom_call.1']
    #allocation5 [shape = 'u8[8192]{0}', space=vmem, size = 0x2000, scoped, tag = 'input window, operand 1, single buffered']
    #allocation6 [shape = 's32[1]{0}', space=sflag, size = 0x4, scoped, tag = 'scoped memory for tpu_custom_call.1']
    #allocation7 [shape = 'u8[16384]{0}', space=vmem, size = 0x4000, scoped, tag = 'input window, operand 3, single buffered']
    #allocation8 [shape = 'u8[16384]{0}', space=vmem, size = 0x4000, scoped, tag = 'input window, operand 5, single buffered']
    #allocation9 [shape = 's32[1]{0}', space=sflag, size = 0x4, scoped, tag = 'scoped memory for tpu_custom_call.1']
    #allocation10 [shape = 'u8[4096]{0}', space=vmem, size = 0x1000, scoped, tag = 'output window, operand 0, single buffered']
    %12 = vsyncpa [#allocation3], 0
    %13 = vsyncpa [#allocation6], 0
    %14 = vsyncpa [#allocation9], 0
    %15 = vsyncpa [#allocation4], 0
    // Predicated region
    $region2: #{tpu_custom_call.1} parent=1 // pred_check
      _
    $region3: #{tpu_custom_call.1} parent=1 // pred_check_branch
      %17 = sbr.rel (0) target = $region5
    $region4: #{tpu_custom_call.1} parent=1 // pred_region
      %19 = vsyncadd [#allocation3], 0
      %s21 = sshll.u32 %s0, 4
      %s22 = int_to_ptr.hbm [resolvable:$true] %s21
      %s23 = sshll.u32 [#allocation2], 4
      %s24 = int_to_ptr.vmem [resolvable:$true] %s23
      %26 = dma.hbm_to_vmem [thread:$0]  %s22, 128, %s24, [#allocation3]
    $region5: #{tpu_custom_call.1} parent=1 // pred_fallthru
      _
    // Predicated region
    $region6: #{tpu_custom_call.1} parent=1 // pred_check
      _
    $region7: #{tpu_custom_call.1} parent=1 // pred_check_branch
      %28 = sbr.rel (0) target = $region9
    $region8: #{tpu_custom_call.1} parent=1 // pred_region
      %30 = vsyncadd [#allocation6], 0
      %s31 = sshll.u32 %s1, 4
      %s32 = int_to_ptr.hbm [resolvable:$true] %s31
      %s33 = sshll.u32 [#allocation5], 4
      %s34 = int_to_ptr.vmem [resolvable:$true] %s33
      %39 = dma.hbm_to_vmem [thread:$0]  %s32, 256, %s34, [#allocation6], 128, 128, 8
    $region9: #{tpu_custom_call.1} parent=1 // pred_fallthru
      _
    // Predicated region
    $region10: #{tpu_custom_call.1} parent=1 // pred_check
      _
    $region11: #{tpu_custom_call.1} parent=1 // pred_check_branch
      %41 = sbr.rel (0) target = $region13
    $region12: #{tpu_custom_call.1} parent=1 // pred_region
      _
    $region13: #{tpu_custom_call.1} parent=1 // pred_fallthru
      _
    // Predicated region
    $region14: #{tpu_custom_call.1} parent=1 // pred_check
      _
    $region15: #{tpu_custom_call.1} parent=1 // pred_check_branch
      %43 = sbr.rel (0) target = $region17
    $region16: #{tpu_custom_call.1} parent=1 // pred_region
      %45 = vsyncadd [#allocation6], 0
      %s46 = sshll.u32 %s3, 4
      %s47 = int_to_ptr.hbm [resolvable:$true] %s46
      %s48 = sshll.u32 [#allocation7], 4
      %s49 = int_to_ptr.vmem [resolvable:$true] %s48
      %54 = dma.hbm_to_vmem [thread:$0]  %s47, 512, %s49, [#allocation6], 128, 128, 8
    $region17: #{tpu_custom_call.1} parent=1 // pred_fallthru
      _
    // Predicated region
    $region18: #{tpu_custom_call.1} parent=1 // pred_check
      _
    $region19: #{tpu_custom_call.1} parent=1 // pred_check_branch
      %56 = sbr.rel (0) target = $region21
    $region20: #{tpu_custom_call.1} parent=1 // pred_region
      _
    $region21: #{tpu_custom_call.1} parent=1 // pred_fallthru
      _
    // Predicated region
    $region22: #{tpu_custom_call.1} parent=1 // pred_check
      _
    $region23: #{tpu_custom_call.1} parent=1 // pred_check_branch
      %58 = sbr.rel (0) target = $region25
    $region24: #{tpu_custom_call.1} parent=1 // pred_region
      %60 = vsyncadd [#allocation9], 0
      %s61 = sshll.u32 %s5, 4
      %s62 = int_to_ptr.hbm [resolvable:$true] %s61
      %s63 = sshll.u32 [#allocation8], 4
      %s64 = int_to_ptr.vmem [resolvable:$true] %s63
      %69 = dma.hbm_to_vmem [thread:$0]  %s62, 512, %s64, [#allocation9], 128, 128, 8
    $region25: #{tpu_custom_call.1} parent=1 // pred_fallthru
      _
    // Predicated region
    $region26: #{tpu_custom_call.1} parent=1 // pred_check
      _
    $region27: #{tpu_custom_call.1} parent=1 // pred_check_branch
      %71 = sbr.rel (0) target = $region29
    $region28: #{tpu_custom_call.1} parent=1 // pred_region
      _
    $region29: #{tpu_custom_call.1} parent=1 // pred_fallthru
      _
    // Predicated region
    $region30: #{tpu_custom_call.1} parent=1 // pred_check
      _
    $region31: #{tpu_custom_call.1} parent=1 // pred_check_branch
      %73 = sbr.rel (0) target = $region33
    $region32: #{tpu_custom_call.1} parent=1 // pred_region
      %75 = dma.done [#allocation3], 128
    $region33: #{tpu_custom_call.1} parent=1 // pred_fallthru
      _
    // Predicated region
    $region34: #{tpu_custom_call.1} parent=1 // pred_check
      _
    $region35: #{tpu_custom_call.1} parent=1 // pred_check_branch
      %77 = sbr.rel (0) target = $region37
    $region36: #{tpu_custom_call.1} parent=1 // pred_region
      %79 = dma.done [#allocation6], 256
    $region37: #{tpu_custom_call.1} parent=1 // pred_fallthru
      _
    // Predicated region
    $region38: #{tpu_custom_call.1} parent=1 // pred_check
      _
    $region39: #{tpu_custom_call.1} parent=1 // pred_check_branch
      %81 = sbr.rel (0) target = $region41
    $region40: #{tpu_custom_call.1} parent=1 // pred_region
      %83 = dma.done [#allocation6], 512
    $region41: #{tpu_custom_call.1} parent=1 // pred_fallthru
      _
    // Predicated region
    $region42: #{tpu_custom_call.1} parent=1 // pred_check
      _
    $region43: #{tpu_custom_call.1} parent=1 // pred_check_branch
      %85 = sbr.rel (0) target = $region45
    $region44: #{tpu_custom_call.1} parent=1 // pred_region
      %87 = dma.done [#allocation9], 512
    $region45: #{tpu_custom_call.1} parent=1 // pred_fallthru
      _
    %v88 = vld [vmem:[#allocation2] sm:$0xff]
    %v89 = vld [vmem:[#allocation5] sm:$0xff]
    %v90 = vld [vmem:[#allocation5 + $0x8] sm:$0xff]
    %v91 = vld [vmem:[%s2] sm:$0x1]
    %v93 = vperm.slane %v91, 0
    %vm95 = vcmask 130048
    %v97 = vsel %vm95, %v88, 0
    %99 = vmatpush.msra.mxu0 0.0
    %100 = vmatpush.msra.mxu0 0.0
    %101 = vmatpush.msra.mxu0 0.0
    %102 = vmatpush.msra.mxu0 0.0
    %103 = vmatpush.msra.mxu0 0.0
    %104 = vmatpush.msra.mxu0 0.0
    %105 = vmatpush.msra.mxu0 0.0
    %106 = vmatpush.msra.mxu0 0.0
    %107 = vmatpush.msra.mxu0 0.0
    %108 = vmatpush.msra.mxu0 0.0
    %109 = vmatpush.msra.mxu0 0.0
    %110 = vmatpush.msra.mxu0 0.0
    %111 = vmatpush.msra.mxu0 0.0
    %112 = vmatpush.msra.mxu0 0.0
    %113 = vmatpush.msra.mxu0 %v90
    %114 = vmatpush.msra.mxu0 %v89
    %115 = vmatmul.f32.gmra.mxu0 %v97
    %v116 = vpop.f32.mrf.mxu0
    %v117 = vadd.f32 %v93, %v116
    %118 = vdwg.mxu0
    %v119 = vtanh.pop %v117
    %v120 = vld [vmem:[#allocation7] sm:$0xff]
    %v121 = vld [vmem:[#allocation7 + $0x8] sm:$0xff]
    %v122 = vld [vmem:[#allocation7 + $0x10] sm:$0xff]
    %v123 = vld [vmem:[#allocation7 + $0x18] sm:$0xff]
    %v124 = vld [vmem:[%s4] sm:$0x1]
    %v126 = vperm.slane %v124, 0
    %vm128 = vcmask 261120
    %v130 = vsel %vm128, %v119, 0
    %132 = vmatpush.msra.mxu0 0.0
    %133 = vmatpush.msra.mxu0 0.0
    %134 = vmatpush.msra.mxu0 0.0
    %135 = vmatpush.msra.mxu0 0.0
    %136 = vmatpush.msra.mxu0 0.0
    %137 = vmatpush.msra.mxu0 0.0
    %138 = vmatpush.msra.mxu0 0.0
    %139 = vmatpush.msra.mxu0 0.0
    %140 = vmatpush.msra.mxu0 0.0
    %141 = vmatpush.msra.mxu0 0.0
    %142 = vmatpush.msra.mxu0 0.0
    %143 = vmatpush.msra.mxu0 0.0
    %144 = vmatpush.msra.mxu0 %v123
    %145 = vmatpush.msra.mxu0 %v122
    %146 = vmatpush.msra.mxu0 %v121
    %147 = vmatpush.msra.mxu0 %v120
    %148 = vmatmul.f32.gmra.mxu0 %v130
    %v149 = vpop.f32.mrf.mxu0
    %v150 = vadd.f32 %v126, %v149
    %151 = vdwg.mxu0
    %v152 = vtanh.pop %v150
    %v153 = vld [vmem:[#allocation8] sm:$0xff]
    %v154 = vld [vmem:[#allocation8 + $0x8] sm:$0xff]
    %v155 = vld [vmem:[#allocation8 + $0x10] sm:$0xff]
    %v156 = vld [vmem:[#allocation8 + $0x18] sm:$0xff]
    %v157 = vld [vmem:[%s6] sm:$0x1]
    %v159 = vperm.slane %v157, 0
    %v162 = vsel %vm128, %v152, 0
    %164 = vmatpush.msra.mxu0 0.0
    %165 = vmatpush.msra.mxu0 0.0
    %166 = vmatpush.msra.mxu0 0.0
    %167 = vmatpush.msra.mxu0 0.0
    %168 = vmatpush.msra.mxu0 0.0
    %169 = vmatpush.msra.mxu0 0.0
    %170 = vmatpush.msra.mxu0 0.0
    %171 = vmatpush.msra.mxu0 0.0
    %172 = vmatpush.msra.mxu0 0.0
    %173 = vmatpush.msra.mxu0 0.0
    %174 = vmatpush.msra.mxu0 0.0
    %175 = vmatpush.msra.mxu0 0.0
    %176 = vmatpush.msra.mxu0 %v156
    %177 = vmatpush.msra.mxu0 %v155
    %178 = vmatpush.msra.mxu0 %v154
    %179 = vmatpush.msra.mxu0 %v153
    %180 = vmatmul.f32.gmra.mxu0 %v162
    %v181 = vpop.f32.mrf.mxu0
    %v182 = vadd.f32 %v159, %v181
    %183 = vdwg.mxu0
    %184 = vst [vmem:[#allocation10] sm:$0xff] %v182
    // Predicated region
    $region46: #{tpu_custom_call.1} parent=1 // pred_check
      _
    $region47: #{tpu_custom_call.1} parent=1 // pred_check_branch
      %186 = sbr.rel (0) target = $region49
    $region48: #{tpu_custom_call.1} parent=1 // pred_region
      %188 = vsyncadd [#allocation4], 0
      %s190 = sshll.u32 [#allocation10], 4
      %s191 = int_to_ptr.vmem [resolvable:$true] %s190
      %s192 = sshll.u32 %s7, 4
      %s193 = int_to_ptr.hbm [resolvable:$true] %s192
      %195 = dma.vmem_to_hbm [thread:$0]  %s191, 128, %s193, [#allocation4]
    $region49: #{tpu_custom_call.1} parent=1 // pred_fallthru
      _
    // Predicated region
    $region50: #{tpu_custom_call.1} parent=1 // pred_check
      _
    $region51: #{tpu_custom_call.1} parent=1 // pred_check_branch
      %197 = sbr.rel (0) target = $region53
    $region52: #{tpu_custom_call.1} parent=1 // pred_region
      %199 = dma.done [#allocation4], 128
    $region53: #{tpu_custom_call.1} parent=1 // pred_fallthru
      _
    %200 = vsyncpa [#allocation3], 1
    %201 = vsyncpa [#allocation6], 1
    %202 = vsyncpa [#allocation9], 1
    %203 = vsyncpa [#allocation4], 1

</llo_original>
